<compile_context>
chip_gen: v7x
topology: tpu7x:2x2x1
jax: 0.10.0
libtpu: 0.0.40
codegen_flags: <defaults>
</compile_context>

<pallas_src>
import math

import jax
import jax.numpy as jnp
from jax.experimental import pallas as pl
from jax.experimental.pallas import tpu as pltpu

# ----------------------------- configuration -------------------------------
B = 2                 # batch
SEQ_LEN = 8           # sequence length
EMBED_DIM = 128       # embed_dim
MLP_MULT = 2          # mlp_multiplier
DROPOUT_LEVEL = 0.0   # dropout_level (eval mode -> identity either way)


# ------------------------------ kernel --------------------------------------
def _gelu(x):
    # Exact (erf) GELU, matching torch.nn.GELU() default.
    # (If VALU-bound at large M, jnp.tanh-approximate GELU routes through the
    #  otherwise-idle EUP slot, at the cost of deviating from torch's default.)
    return 0.5 * x * (1.0 + jax.lax.erf(x * (1.0 / math.sqrt(2.0))))


def _mlp_kernel(x_ref, w1_ref, b1_ref, w2_ref, b2_ref, o_ref):
    # Fused Linear -> GELU -> Linear. Dropout is identity in eval mode.
    # bf16 operands into the MXU, f32 accumulation.
    x = x_ref[...].astype(jnp.bfloat16)                               # (tm, D)
    h = jnp.dot(x, w1_ref[...], preferred_element_type=jnp.float32)   # (tm, Dh) f32
    h = _gelu(h + b1_ref[...])
    h = h.astype(jnp.bfloat16)                                        # bf16 into 2nd dot
    o = jnp.dot(h, w2_ref[...], preferred_element_type=jnp.float32) + b2_ref[...]
    o_ref[...] = o.astype(o_ref.dtype)                                # (tm, D) lane-dense


# --------------------------- tile / VMEM helpers -----------------------------
def _round_up(x, m):
    return ((x + m - 1) // m) * m


def _pick_tm(M):
    """Row-tile size: sublane-aligned, >=2 grid steps when possible (v7x megacore),
    multiples of 256 at large M (v6e/v7x MXU pass size)."""
    if M >= 1024:
        return 512
    if M >= 512:
        return 256
    # Small M: keep (8,128)-aligned tiles but aim for >= 2 grid steps so both
    # v7x TensorCores get work. Never below 8 sublanes.
    half = pl.cdiv(M, 2)
    tm = _round_up(half, 8)
    return max(8, min(tm, _round_up(M, 8)))


def _vmem_budget_bytes(tm, D, Dh):
    bf16, f32 = 2, 4
    x_bufs = 2 * tm * D * f32            # double-buffered input rows
    o_bufs = 2 * tm * D * f32            # double-buffered output rows
    weights = 2 * D * Dh * bf16          # W1 + W2, single-buffered (Buffered(1))
    biases = (Dh + D) * f32
    h_tmp = tm * Dh * (f32 + bf16)       # f32 GELU intermediate + bf16 copy
    return x_bufs + o_bufs + weights + biases + h_tmp


# ------------------------------ wrapper --------------------------------------
def mlp_forward(params, x):
    """x: (..., D) like the PyTorch module; returns the same shape/dtype."""
    orig_shape = x.shape
    D = orig_shape[-1]
    Dh = params["w1"].shape[1]

    x2 = x.reshape(-1, D)          # flatten batch*seq into the matmul M dimension
    M = x2.shape[0]

    tm = _pick_tm(M)
    grid = (pl.cdiv(M, tm),)       # final partial block (if any) is masked by Pallas

    # bf16 weights: halves resident-weight VMEM and weight DMA, native MXU dtype.
    w1 = params["w1"].astype(jnp.bfloat16)
    w2 = params["w2"].astype(jnp.bfloat16)
    b1 = params["b1"]              # biases stay f32 (added to the f32 accumulator)
    b2 = params["b2"]

    # Constant-index weight/bias blocks -> single-buffer them (no re-DMA across grid).
    def resident(shape):
        return pl.BlockSpec(shape, lambda i: (0, 0), pipeline_mode=pl.Buffered(1))

    vmem_needed = _vmem_budget_bytes(tm, D, Dh)
    vmem_limit = None
    if vmem_needed > 32 * 1024 * 1024:   # only raise past the scoped default
        vmem_limit = min(int(vmem_needed * 3 // 2), 100 * 1024 * 1024)

    out = pl.pallas_call(
        _mlp_kernel,
        out_shape=jax.ShapeDtypeStruct((M, D), x.dtype),
        grid=grid,
        in_specs=[
            pl.BlockSpec((tm, D), lambda i: (i, 0)),   # x rows (pipelined)
            resident((D, Dh)), resident((1, Dh)),      # W1, b1 (VMEM-resident)
            resident((Dh, D)), resident((1, D)),       # W2, b2
        ],
        out_specs=pl.BlockSpec((tm, D), lambda i: (i, 0)),
        compiler_params=pltpu.CompilerParams(
            dimension_semantics=("parallel",),         # v7x: 2 TCs split the row grid
            vmem_limit_bytes=vmem_limit),
    )(x2, w1, b1, w2, b2)
    # TODO(synk): training-mode dropout (p=dropout_level) not implemented; eval-mode identity only.
    return out.reshape(orig_shape)


# --------------------------- parameter init ----------------------------------
def init_params(key):
    D, Dh = EMBED_DIM, MLP_MULT * EMBED_DIM
    k1, k2, k3, k4 = jax.random.split(key, 4)
    # torch.nn.Linear default init: U(-1/sqrt(fan_in), 1/sqrt(fan_in))
    s1 = 1.0 / math.sqrt(D)
    s2 = 1.0 / math.sqrt(Dh)
    return {
        "w1": jax.random.uniform(k1, (D, Dh), jnp.float32, -s1, s1),
        "b1": jax.random.uniform(k2, (1, Dh), jnp.float32, -s1, s1),
        "w2": jax.random.uniform(k3, (Dh, D), jnp.float32, -s2, s2),
        "b2": jax.random.uniform(k4, (1, D), jnp.float32, -s2, s2),
    }


# -------------------------------- main ---------------------------------------
if __name__ == "__main__":
    key = jax.random.PRNGKey(0)
    kx, kp = jax.random.split(key)

    x = jax.random.normal(kx, (B, SEQ_LEN, EMBED_DIM), dtype=jnp.float32)
    params = init_params(kp)

    out = jax.jit(mlp_forward)(params, x)
    out = jax.block_until_ready(out)

    # Mixed-precision reference that mirrors the kernel's bf16-operand /
    # f32-accumulate path (tight tolerance), plus a loose f32 sanity check.
    xb = x.astype(jnp.bfloat16)
    w1b = params["w1"].astype(jnp.bfloat16)
    w2b = params["w2"].astype(jnp.bfloat16)
    h = jnp.dot(xb, w1b, preferred_element_type=jnp.float32) + params["b1"]
    h = 0.5 * h * (1.0 + jax.lax.erf(h / math.sqrt(2.0)))
    ref_mixed = (jnp.dot(h.astype(jnp.bfloat16), w2b,
                         preferred_element_type=jnp.float32) + params["b2"])

    h32 = jnp.dot(x, params["w1"]) + params["b1"]
    h32 = 0.5 * h32 * (1.0 + jax.lax.erf(h32 / math.sqrt(2.0)))
    ref_f32 = jnp.dot(h32, params["w2"]) + params["b2"]

    assert out.shape == (B, SEQ_LEN, EMBED_DIM), out.shape
    assert bool(jnp.all(jnp.isfinite(out)))
    assert bool(jnp.allclose(out, ref_mixed, atol=2e-2, rtol=2e-2))
    assert bool(jnp.allclose(out, ref_f32, atol=1e-1, rtol=1e-1))
    print("KERNEL_OK")
</pallas_src>

<mosaic_0001>
module attributes {stable_mosaic.version = 11 : i64} {
  func.func @_mlp_kernel(%arg0: i32, %arg1: memref<8x128xf32, #tpu.memory_space<vmem>>, %arg2: memref<128x256xbf16, #tpu.memory_space<vmem>>, %arg3: memref<1x256xf32, #tpu.memory_space<vmem>>, %arg4: memref<256x128xbf16, #tpu.memory_space<vmem>>, %arg5: memref<1x128xf32, #tpu.memory_space<vmem>>, %arg6: memref<8x128xf32, #tpu.memory_space<vmem>>) attributes {dimension_semantics = [#tpu.dimension_semantics<parallel>], iteration_bounds = array<i64: 2>, scalar_prefetch = 0 : i64, scratch_operands = 0 : i64, tpu.core_type = #tpu.core_type<tc>, window_params = [{transform_indices = @transform_0, window_bounds = array<i64: 8, 128>}, {pipeline_mode = #tpu.pipeline_mode<synchronous>, transform_indices = @transform_1, window_bounds = array<i64: 128, 256>}, {pipeline_mode = #tpu.pipeline_mode<synchronous>, transform_indices = @transform_2, window_bounds = array<i64: 1, 256>}, {pipeline_mode = #tpu.pipeline_mode<synchronous>, transform_indices = @transform_3, window_bounds = array<i64: 256, 128>}, {pipeline_mode = #tpu.pipeline_mode<synchronous>, transform_indices = @transform_4, window_bounds = array<i64: 1, 128>}, {transform_indices = @transform_5, window_bounds = array<i64: 8, 128>}]} {
    %c0 = arith.constant 0 : index
    %c0_0 = arith.constant 0 : index
    %0 = vector.load %arg1[%c0, %c0_0] : memref<8x128xf32, #tpu.memory_space<vmem>>, vector<8x128xf32>
    %1 = arith.truncf %0 : vector<8x128xf32> to vector<8x128xbf16>
    %c0_1 = arith.constant 0 : index
    %c0_2 = arith.constant 0 : index
    %2 = vector.load %arg2[%c0_1, %c0_2] : memref<128x256xbf16, #tpu.memory_space<vmem>>, vector<128x256xbf16>
    %cst = arith.constant dense<0.000000e+00> : vector<8x256xf32>
    %3 = tpu.matmul %1, %2, %cst {dimension_numbers = #tpu.dot_dimension_numbers<[1], [0], [0], [1], [0, 0, 1, 1], [], []>} : vector<8x128xbf16>, vector<128x256xbf16>, vector<8x256xf32> -> vector<8x256xf32>
    %c0_3 = arith.constant 0 : index
    %c0_4 = arith.constant 0 : index
    %4 = vector.load %arg3[%c0_3, %c0_4] : memref<1x256xf32, #tpu.memory_space<vmem>>, vector<1x256xf32>
    %5 = vector.broadcast %4 : vector<1x256xf32> to vector<8x256xf32>
    %6 = arith.addf %3, %5 : vector<8x256xf32>
    %cst_5 = arith.constant 5.000000e-01 : f32
    %7 = vector.broadcast %cst_5 : f32 to vector<8x256xf32>
    %8 = arith.mulf %7, %6 : vector<8x256xf32>
    %cst_6 = arith.constant 0.707106769 : f32
    %9 = vector.broadcast %cst_6 : f32 to vector<8x256xf32>
    %10 = arith.mulf %6, %9 : vector<8x256xf32>
    %11 = math.erf %10 : vector<8x256xf32>
    %cst_7 = arith.constant 1.000000e+00 : f32
    %12 = vector.broadcast %cst_7 : f32 to vector<8x256xf32>
    %13 = arith.addf %12, %11 : vector<8x256xf32>
    %14 = arith.mulf %8, %13 : vector<8x256xf32>
    %15 = arith.truncf %14 : vector<8x256xf32> to vector<8x256xbf16>
    %c0_8 = arith.constant 0 : index
    %c0_9 = arith.constant 0 : index
    %16 = vector.load %arg4[%c0_8, %c0_9] : memref<256x128xbf16, #tpu.memory_space<vmem>>, vector<256x128xbf16>
    %cst_10 = arith.constant dense<0.000000e+00> : vector<8x128xf32>
    %17 = tpu.matmul %15, %16, %cst_10 {dimension_numbers = #tpu.dot_dimension_numbers<[1], [0], [0], [1], [0, 0, 1, 1], [], []>} : vector<8x256xbf16>, vector<256x128xbf16>, vector<8x128xf32> -> vector<8x128xf32>
    %c0_11 = arith.constant 0 : index
    %c0_12 = arith.constant 0 : index
    %18 = vector.load %arg5[%c0_11, %c0_12] : memref<1x128xf32, #tpu.memory_space<vmem>>, vector<1x128xf32>
    %19 = vector.broadcast %18 : vector<1x128xf32> to vector<8x128xf32>
    %20 = arith.addf %17, %19 : vector<8x128xf32>
    %c0_13 = arith.constant 0 : index
    %c0_14 = arith.constant 0 : index
    %21 = vector.load %arg6[%c0_13, %c0_14] : memref<8x128xf32, #tpu.memory_space<vmem>>, vector<8x128xf32>
    tpu.vector_store %arg6[%c0_13, %c0_14], %20 {strides = array<i32>} : memref<8x128xf32, #tpu.memory_space<vmem>>, vector<8x128xf32>,
    return
  }
  func.func @transform_0(%arg0: i32) -> (i32, i32) {
    %c0_i32 = arith.constant 0 : i32
    %c0_i32_0 = arith.constant 0 : i32
    return %arg0, %c0_i32 : i32, i32
  }
  func.func @transform_1(%arg0: i32) -> (i32, i32) {
    %c0_i32 = arith.constant 0 : i32
    %c0_i32_0 = arith.constant 0 : i32
    %c0_i32_1 = arith.constant 0 : i32
    return %c0_i32, %c0_i32_0 : i32, i32
  }
  func.func @transform_2(%arg0: i32) -> (i32, i32) {
    %c0_i32 = arith.constant 0 : i32
    %c0_i32_0 = arith.constant 0 : i32
    %c0_i32_1 = arith.constant 0 : i32
    return %c0_i32, %c0_i32_0 : i32, i32
  }
  func.func @transform_3(%arg0: i32) -> (i32, i32) {
    %c0_i32 = arith.constant 0 : i32
    %c0_i32_0 = arith.constant 0 : i32
    %c0_i32_1 = arith.constant 0 : i32
    return %c0_i32, %c0_i32_0 : i32, i32
  }
  func.func @transform_4(%arg0: i32) -> (i32, i32) {
    %c0_i32 = arith.constant 0 : i32
    %c0_i32_0 = arith.constant 0 : i32
    %c0_i32_1 = arith.constant 0 : i32
    return %c0_i32, %c0_i32_0 : i32, i32
  }
  func.func @transform_5(%arg0: i32) -> (i32, i32) {
    %c0_i32 = arith.constant 0 : i32
    %c0_i32_0 = arith.constant 0 : i32
    return %arg0, %c0_i32 : i32, i32
  }
}

</mosaic_0001>

<llo_original>
// kernel: mlp_forward.1
$region0: #{mlp_forward.1}
  #allocation0 [shape = 'u32[]', space=smem, size = 0x4, offset = 0x4, fixed_abs, tag = 'smem constant byte address 0x4 - core index']
  #allocation1 [shape = 'u32[144,128]{1,0:T(1,128)}', space=vmem, size = 0x12000, scoped, tag = 'internal scratch']
  %s0 = inlined_call_operand.vmem [shape: f32[16,128], index: 0, kind: input, shape index: {}]
  %s1 = inlined_call_operand.vmem [shape: bf16[128,256], index: 1, kind: input, shape index: {}]
  %s2 = inlined_call_operand.vmem [shape: f32[1,256], index: 2, kind: input, shape index: {}]
  %s3 = inlined_call_operand.vmem [shape: bf16[256,128], index: 3, kind: input, shape index: {}]
  %s4 = inlined_call_operand.vmem [shape: f32[1,128], index: 4, kind: input, shape index: {}]
  %s5 = inlined_call_operand.hbm [shape: f32[16,128], index: 5, kind: output, shape index: {}]
  %s6 = sld [smem:[#allocation0]]
  $region53: #{mlp_forward.1} parent=0
    _
  %s8 = ssub.s32 1, %s6
  %s9 = scalar_select 0, %s8, %s6
  $region1: #{mlp_forward.1} parent=0
    #allocation2 [shape = 'u8[8192]{0}', space=vmem, size = 0x2000, scoped, tag = 'output window, operand 0']
    #allocation3 [shape = 's32[2]{0}', space=sflag, size = 0x8, scoped, tag = 'scoped memory for mlp_forward.1']
    %10 = vsyncpa [#allocation3], 0
    %s11 = scalar_lea.sflag [#allocation3], 1
    %12 = vsyncpa %s11, 0
    loop: start=0, step=1, limit=4
    $region2: #{mlp_forward.1} parent=1 // loop_pre_header
      _
    $region3: #{mlp_forward.1} parent=1 // loop_header
      %s14 = sphi 0, %s18
      %p15 = scmp.ge.s32.totalorder %s14, 4
      %s24 = sphi 0, %s26
      %s27 = sphi 0, %s24
      %s28 = sphi 0, %s27
      %s44 = sphi 0, %s28
      %s48 = sphi 0, %s48
      %s50 = sphi 0, %s48
      %s51 = sphi 0, %s50
      %s65 = sphi 0, %s51
      %s69 = sphi 0, %s69
      %s71 = sphi 0, %s69
      %s72 = sphi 0, %s71
      %s86 = sphi 0, %s72
      %s90 = sphi 0, %s90
      %s92 = sphi 0, %s90
      %s93 = sphi 0, %s92
      %s107 = sphi 0, %s93
      %s111 = sphi 0, %s111
      %s113 = sphi 0, %s111
      %s114 = sphi 0, %s113
      %s128 = sphi 0, %s114
      %s134 = sphi 0, %s136
      %s137 = sphi 0, %s134
      %s138 = sphi 0, %s137
      %s154 = sphi 0, %s138
    $region4: #{mlp_forward.1} parent=1 // loop_header_branch
      %17 = sbr.rel (%p15) target = $region8
    $region5: #{mlp_forward.1} parent=1 // loop_body
      %s19 = ssub.s32 %s14, 1
      %s20 = ssub.s32 %s14, 2
      %s21 = sadd.s32 %s14, 1
      %s22 = ssub.s32 %s14, %s21
      %p23 = scmp.eq.s32.totalorder %s22, 0
      %s25 = sadd.s32 %s24, 1
      %s26 = scalar_select %p23, %s24, %s25
      %p29 = pneg %p23
      %p30 = scmp.eq.s32.totalorder %s14, 1
      %p31 = por %p29, %p30
      %p32 = scmp.ne.s32.totalorder %s24, %s27
      %p33 = scmp.eq.s32.totalorder %s14, 0
      %p34 = por %p32, %p33
      %p35 = scmp.ne.s32.totalorder %s24, %s27
      %p36 = scmp.eq.s32.totalorder %s19, 1
      %p37 = por %p35, %p36
      %p38 = scmp.ne.s32.totalorder %s27, %s28
      %p39 = scmp.eq.s32.totalorder %s19, 0
      %p40 = por %p38, %p39
      %p41 = scmp.ne.s32.totalorder %s27, %s28
      %p42 = scmp.eq.s32.totalorder %s20, 1
      %p43 = por %p41, %p42
      %p45 = scmp.ne.s32.totalorder %s28, %s44
      %p46 = scmp.eq.s32.totalorder %s20, 0
      %p47 = por %p45, %p46
      %s49 = sadd.s32 %s48, 1
      %p52 = scmp.eq.s32.totalorder %s14, 1
      %p53 = scmp.ne.s32.totalorder %s48, %s50
      %p54 = scmp.eq.s32.totalorder %s14, 0
      %p55 = por %p53, %p54
      %p56 = scmp.ne.s32.totalorder %s48, %s50
      %p57 = scmp.eq.s32.totalorder %s19, 1
      %p58 = por %p56, %p57
      %p59 = scmp.ne.s32.totalorder %s50, %s51
      %p60 = scmp.eq.s32.totalorder %s19, 0
      %p61 = por %p59, %p60
      %p62 = scmp.ne.s32.totalorder %s50, %s51
      %p63 = scmp.eq.s32.totalorder %s20, 1
      %p64 = por %p62, %p63
      %p66 = scmp.ne.s32.totalorder %s51, %s65
      %p67 = scmp.eq.s32.totalorder %s20, 0
      %p68 = por %p66, %p67
      %s70 = sadd.s32 %s69, 1
      %p73 = scmp.eq.s32.totalorder %s14, 1
      %p74 = scmp.ne.s32.totalorder %s69, %s71
      %p75 = scmp.eq.s32.totalorder %s14, 0
      %p76 = por %p74, %p75
      %p77 = scmp.ne.s32.totalorder %s69, %s71
      %p78 = scmp.eq.s32.totalorder %s19, 1
      %p79 = por %p77, %p78
      %p80 = scmp.ne.s32.totalorder %s71, %s72
      %p81 = scmp.eq.s32.totalorder %s19, 0
      %p82 = por %p80, %p81
      %p83 = scmp.ne.s32.totalorder %s71, %s72
      %p84 = scmp.eq.s32.totalorder %s20, 1
      %p85 = por %p83, %p84
      %p87 = scmp.ne.s32.totalorder %s72, %s86
      %p88 = scmp.eq.s32.totalorder %s20, 0
      %p89 = por %p87, %p88
      %s91 = sadd.s32 %s90, 1
      %p94 = scmp.eq.s32.totalorder %s14, 1
      %p95 = scmp.ne.s32.totalorder %s90, %s92
      %p96 = scmp.eq.s32.totalorder %s14, 0
      %p97 = por %p95, %p96
      %p98 = scmp.ne.s32.totalorder %s90, %s92
      %p99 = scmp.eq.s32.totalorder %s19, 1
      %p100 = por %p98, %p99
      %p101 = scmp.ne.s32.totalorder %s92, %s93
      %p102 = scmp.eq.s32.totalorder %s19, 0
      %p103 = por %p101, %p102
      %p104 = scmp.ne.s32.totalorder %s92, %s93
      %p105 = scmp.eq.s32.totalorder %s20, 1
      %p106 = por %p104, %p105
      %p108 = scmp.ne.s32.totalorder %s93, %s107
      %p109 = scmp.eq.s32.totalorder %s20, 0
      %p110 = por %p108, %p109
      %s112 = sadd.s32 %s111, 1
      %p115 = scmp.eq.s32.totalorder %s14, 1
      %p116 = scmp.ne.s32.totalorder %s111, %s113
      %p117 = scmp.eq.s32.totalorder %s14, 0
      %p118 = por %p116, %p117
      %p119 = scmp.ne.s32.totalorder %s111, %s113
      %p120 = scmp.eq.s32.totalorder %s19, 1
      %p121 = por %p119, %p120
      %p122 = scmp.ne.s32.totalorder %s113, %s114
      %p123 = scmp.eq.s32.totalorder %s19, 0
      %p124 = por %p122, %p123
      %p125 = scmp.ne.s32.totalorder %s113, %s114
      %p126 = scmp.eq.s32.totalorder %s20, 1
      %p127 = por %p125, %p126
      %p129 = scmp.ne.s32.totalorder %s114, %s128
      %p130 = scmp.eq.s32.totalorder %s20, 0
      %p131 = por %p129, %p130
      %s132 = ssub.s32 %s14, %s21
      %p133 = scmp.eq.s32.totalorder %s132, 0
      %s135 = sadd.s32 %s134, 1
      %s136 = scalar_select %p133, %s134, %s135
      %p139 = pneg %p133
      %p140 = scmp.eq.s32.totalorder %s14, 1
      %p141 = por %p139, %p140
      %p142 = scmp.ne.s32.totalorder %s134, %s137
      %p143 = scmp.eq.s32.totalorder %s14, 0
      %p144 = por %p142, %p143
      %p145 = scmp.ne.s32.totalorder %s134, %s137
      %p146 = scmp.eq.s32.totalorder %s19, 1
      %p147 = por %p145, %p146
      %p148 = scmp.ne.s32.totalorder %s137, %s138
      %p149 = scmp.eq.s32.totalorder %s19, 0
      %p150 = por %p148, %p149
      %p151 = scmp.ne.s32.totalorder %s137, %s138
      %p152 = scmp.eq.s32.totalorder %s20, 1
      %p153 = por %p151, %p152
      %p155 = scmp.ne.s32.totalorder %s138, %s154
      %p156 = scmp.eq.s32.totalorder %s20, 0
      %p157 = por %p155, %p156
      %p158 = scmp.le.s32.totalorder 1, %s14
      %p159 = scmp.lt.s32.totalorder %s14, 3
      %p160 = pnand %p158, %p159
      %p161 = pneg %p160
      // Predicated region
      $region9: #{mlp_forward.1} parent=5 // pred_check
        _
      $region10: #{mlp_forward.1} parent=5 // pred_check_branch
        %163 = sbr.rel (%p160) target = $region12
      $region11: #{mlp_forward.1} parent=5 // pred_region
        %s164 = ssub.s32 %s14, 1
        // Predicated region
        $region13: #{mlp_forward.1} parent=11 // pred_check
          %p165 = pneg %p61
        $region14: #{mlp_forward.1} parent=11 // pred_check_branch
          %167 = sbr.rel (%p165) target = $region16
        $region15: #{mlp_forward.1} parent=11 // pred_region
          _
        $region16: #{mlp_forward.1} parent=11 // pred_fallthru
          _
        // Predicated region
        $region17: #{mlp_forward.1} parent=11 // pred_check
          %p168 = pneg %p82
        $region18: #{mlp_forward.1} parent=11 // pred_check_branch
          %170 = sbr.rel (%p168) target = $region20
        $region19: #{mlp_forward.1} parent=11 // pred_region
          _
        $region20: #{mlp_forward.1} parent=11 // pred_fallthru
          _
        // Predicated region
        $region21: #{mlp_forward.1} parent=11 // pred_check
          %p171 = pneg %p103
        $region22: #{mlp_forward.1} parent=11 // pred_check_branch
          %173 = sbr.rel (%p171) target = $region24
        $region23: #{mlp_forward.1} parent=11 // pred_region
          _
        $region24: #{mlp_forward.1} parent=11 // pred_fallthru
          _
        // Predicated region
        $region25: #{mlp_forward.1} parent=11 // pred_check
          %p174 = pneg %p124
        $region26: #{mlp_forward.1} parent=11 // pred_check_branch
          %176 = sbr.rel (%p174) target = $region28
        $region27: #{mlp_forward.1} parent=11 // pred_region
          _
        $region28: #{mlp_forward.1} parent=11 // pred_fallthru
          _
      $region12: #{mlp_forward.1} parent=5 // pred_fallthru
        _
      %p177 = scmp.lt.s32.totalorder %s14, 2
      // Predicated region
      $region29: #{mlp_forward.1} parent=5 // pred_check
        %p178 = pneg %p177
      $region30: #{mlp_forward.1} parent=5 // pred_check_branch
        %180 = sbr.rel (%p178) target = $region32
      $region31: #{mlp_forward.1} parent=5 // pred_region
        // Predicated region
        $region33: #{mlp_forward.1} parent=31 // pred_check
          %p181 = pneg %p34
        $region34: #{mlp_forward.1} parent=31 // pred_check_branch
          %183 = sbr.rel (%p181) target = $region36
        $region35: #{mlp_forward.1} parent=31 // pred_region
          %p184 = scmp.lt.s32.totalorder %s14, 1
          %s185 = scalar_select %p184, %s14, 1
          %s186 = smul.addr %s185, 8
          %s187 = scalar_lea.vmem %s0, %s186
        $region36: #{mlp_forward.1} parent=31 // pred_fallthru
          _
      $region32: #{mlp_forward.1} parent=5 // pred_fallthru
        _
      %p188 = scmp.le.s32.totalorder 1, %s14
      %p189 = scmp.lt.s32.totalorder %s14, 3
      %p190 = pnand %p188, %p189
      %p191 = pneg %p190
      // Predicated region
      $region37: #{mlp_forward.1} parent=5 // pred_check
        _
      $region38: #{mlp_forward.1} parent=5 // pred_check_branch
        %193 = sbr.rel (%p190) target = $region40
      $region39: #{mlp_forward.1} parent=5 // pred_region
        %s194 = ssub.s32 %s14, 1
        %p195 = scmp.lt.s32.totalorder %s19, 1
        %s196 = scalar_select %p195, %s19, 1
        %s197 = smul.addr %s196, 8
        %s198 = scalar_lea.vmem %s0, %s197
        %p199 = pneg %p40
        %p200 = pneg %p37
        %p201 = pneg %p61
        %p202 = pneg %p58
        %p203 = pneg %p82
        %p204 = pneg %p79
        %p205 = pneg %p103
        %p206 = pneg %p100
        %p207 = pneg %p124
        %p208 = pneg %p121
        %p209 = pneg %p150
        %p210 = pneg %p147
        %s211 = sand.u32 %s137, 1
        %s212 = scalar_lea.sflag [#allocation3], %s211
        %s213 = sand.u32 %s137, 1
        %s214 = smul.addr %s213, 8
        %s215 = scalar_lea.vmem [#allocation2], %s214
        %p216 = scmp.lt.s32.totalorder %s19, 1
        %s217 = scalar_select %p216, %s19, 1
        %s218 = smul.addr %s217, 8
        %s219 = scalar_lea.vmem %s0, %s218
        %v221 = vld [vmem:[%s219] sm:$0xff]
        %v222 = vpack.c.bf16 %v221, %v221
        %v223 = vld [vmem:[%s1] sm:$0xff]
        %v224 = vld [vmem:[%s1 + $0x8] sm:$0xff]
        %v225 = vld [vmem:[%s1 + $0x10] sm:$0xff]
        %v226 = vld [vmem:[%s1 + $0x18] sm:$0xff]
        %v227 = vld [vmem:[%s1 + $0x20] sm:$0xff]
        %v228 = vld [vmem:[%s1 + $0x28] sm:$0xff]
        %v229 = vld [vmem:[%s1 + $0x30] sm:$0xff]
        %v230 = vld [vmem:[%s1 + $0x38] sm:$0xff]
        %v231 = vld [vmem:[%s1 + $0x40] sm:$0xff]
        %v232 = vld [vmem:[%s1 + $0x48] sm:$0xff]
        %v233 = vld [vmem:[%s1 + $0x50] sm:$0xff]
        %v234 = vld [vmem:[%s1 + $0x58] sm:$0xff]
        %v235 = vld [vmem:[%s1 + $0x60] sm:$0xff]
        %v236 = vld [vmem:[%s1 + $0x68] sm:$0xff]
        %v237 = vld [vmem:[%s1 + $0x70] sm:$0xff]
        %v238 = vld [vmem:[%s1 + $0x78] sm:$0xff]
        %v239 = vld [vmem:[%s2] sm:$0x3]
        %v241 = vlaneseq
        %v242 = vshrl.u32 %v241, 7
        %v243 = vsub.s32 0, %v242
        %v244 = vrot.slane %v239, %v243
        %v245 = vlaneseq
        %v246 = vshrl.u32 %v245, 7
        %v247 = vsub.s32 1, %v246
        %v248 = vrot.slane %v239, %v247
        %v267 = vunpack.c.l.b16 %v223
        %v268 = vunpack.c.h.b16 %v223
        %v269 = vunpack.c.l.b16 %v224
        %v270 = vunpack.c.h.b16 %v224
        %v271 = vunpack.c.l.b16 %v225
        %v272 = vunpack.c.h.b16 %v225
        %v273 = vunpack.c.l.b16 %v226
        %v274 = vunpack.c.h.b16 %v226
        %v275 = vunpack.c.l.b16 %v227
        %v276 = vunpack.c.h.b16 %v227
        %v277 = vunpack.c.l.b16 %v228
        %v278 = vunpack.c.h.b16 %v228
        %v279 = vunpack.c.l.b16 %v229
        %v280 = vunpack.c.h.b16 %v229
        %v281 = vunpack.c.l.b16 %v230
        %v282 = vunpack.c.h.b16 %v230
        %v283 = vunpack.c.l.b16 %v231
        %v284 = vunpack.c.h.b16 %v231
        %v285 = vunpack.c.l.b16 %v232
        %v286 = vunpack.c.h.b16 %v232
        %v287 = vunpack.c.l.b16 %v233
        %v288 = vunpack.c.h.b16 %v233
        %v289 = vunpack.c.l.b16 %v234
        %v290 = vunpack.c.h.b16 %v234
        %v291 = vunpack.c.l.b16 %v235
        %v292 = vunpack.c.h.b16 %v235
        %v293 = vunpack.c.l.b16 %v236
        %v294 = vunpack.c.h.b16 %v236
        %v295 = vunpack.c.l.b16 %v237
        %v296 = vunpack.c.h.b16 %v237
        %v297 = vunpack.c.l.b16 %v238
        %v298 = vunpack.c.h.b16 %v238
        %v299 = vpack.c.b16 %v269, %v267
        %v300 = vpack.c.b16 %v270, %v268
        %v301 = vpack.c.b16 %v273, %v271
        %v302 = vpack.c.b16 %v274, %v272
        %v303 = vpack.c.b16 %v277, %v275
        %v304 = vpack.c.b16 %v278, %v276
        %v305 = vpack.c.b16 %v281, %v279
        %v306 = vpack.c.b16 %v282, %v280
        %v307 = vpack.c.b16 %v285, %v283
        %v308 = vpack.c.b16 %v286, %v284
        %v309 = vpack.c.b16 %v289, %v287
        %v310 = vpack.c.b16 %v290, %v288
        %v311 = vpack.c.b16 %v293, %v291
        %v312 = vpack.c.b16 %v294, %v292
        %v313 = vpack.c.b16 %v297, %v295
        %v314 = vpack.c.b16 %v298, %v296
        %331 = vmatprep.subr.bf16.mxu0 %v300
        %332 = vmatpush1.bf16.msra.mxu0 %v299
        %333 = vmatprep.subr.bf16.mxu0 %v302
        %334 = vmatpush1.bf16.msra.mxu0 %v301
        %335 = vmatprep.subr.bf16.mxu0 %v304
        %336 = vmatpush1.bf16.msra.mxu0 %v303
        %337 = vmatprep.subr.bf16.mxu0 %v306
        %338 = vmatpush1.bf16.msra.mxu0 %v305
        %339 = vmatprep.subr.bf16.mxu0 %v308
        %340 = vmatpush1.bf16.msra.mxu0 %v307
        %341 = vmatprep.subr.bf16.mxu0 %v310
        %342 = vmatpush1.bf16.msra.mxu0 %v309
        %343 = vmatprep.subr.bf16.mxu0 %v312
        %344 = vmatpush1.bf16.msra.mxu0 %v311
        %345 = vmatprep.subr.bf16.mxu0 %v314
        %346 = vmatpush1.bf16.msra.mxu0 %v313
        %347 = vmatprep.subr.bf16.mxu0 0
        %348 = vmatpush1.bf16.msra.mxu0 0
        %349 = vmatprep.subr.bf16.mxu0 0
        %350 = vmatpush1.bf16.msra.mxu0 0
        %351 = vmatprep.subr.bf16.mxu0 0
        %352 = vmatpush1.bf16.msra.mxu0 0
        %353 = vmatprep.subr.bf16.mxu0 0
        %354 = vmatpush1.bf16.msra.mxu0 0
        %355 = vmatprep.subr.bf16.mxu0 0
        %356 = vmatpush1.bf16.msra.mxu0 0
        %357 = vmatprep.subr.bf16.mxu0 0
        %358 = vmatpush1.bf16.msra.mxu0 0
        %359 = vmatprep.subr.bf16.mxu0 0
        %360 = vmatpush1.bf16.msra.mxu0 0
        %361 = vmatprep.subr.bf16.mxu0 0
        %362 = vmatpush1.bf16.msra.mxu0 0
        %363 = vmatprep.mubr.bf16.mxu0 0
        %364 = vmatmul.mubr.bf16.gmra.mrb[0].mxu0 %v222
        %v365 = vpop.f32.mrb[0].mxu0
        %v366 = vadd.f32 %v244, %v365
        %v367 = vpop.f32.mrb[0].mxu0
        %v368 = vadd.f32 %v248, %v367
        %v369 = vpop.f32.mrb[0].mxu0
        %v370 = vpop.f32.mrb[0].mxu0
        %371 = vdwg.mxu0
        %v372 = vmul.f32 %v366, 0.5
        %v373 = vmul.f32 %v368, 0.5
        %v374 = vmul.f32 %v366, 0.70710677
        %v375 = vmul.f32 %v368, 0.70710677
        %v376 = verf.f32.pop %v374
        %v377 = verf.f32.pop %v375
        %v378 = vadd.f32 %v376, 1.0
        %v379 = vadd.f32 %v377, 1.0
        %v380 = vmul.f32 %v372, %v378
        %v381 = vmul.f32 %v373, %v379
        %v382 = vpack.c.bf16 %v380, %v380
        %v383 = vpack.c.bf16 %v381, %v381
        %v384 = vld [vmem:[%s3] sm:$0xf]
        %v385 = vld [vmem:[%s3 + $0x4] sm:$0xf]
        %v386 = vld [vmem:[%s3 + $0x8] sm:$0xf]
        %v387 = vld [vmem:[%s3 + $0xc] sm:$0xf]
        %v388 = vld [vmem:[%s3 + $0x10] sm:$0xf]
        %v389 = vld [vmem:[%s3 + $0x14] sm:$0xf]
        %v390 = vld [vmem:[%s3 + $0x18] sm:$0xf]
        %v391 = vld [vmem:[%s3 + $0x1c] sm:$0xf]
        %v392 = vld [vmem:[%s3 + $0x20] sm:$0xf]
        %v393 = vld [vmem:[%s3 + $0x24] sm:$0xf]
        %v394 = vld [vmem:[%s3 + $0x28] sm:$0xf]
        %v395 = vld [vmem:[%s3 + $0x2c] sm:$0xf]
        %v396 = vld [vmem:[%s3 + $0x30] sm:$0xf]
        %v397 = vld [vmem:[%s3 + $0x34] sm:$0xf]
        %v398 = vld [vmem:[%s3 + $0x38] sm:$0xf]
        %v399 = vld [vmem:[%s3 + $0x3c] sm:$0xf]
        %v400 = vld [vmem:[%s3 + $0x40] sm:$0xf]
        %v401 = vld [vmem:[%s3 + $0x44] sm:$0xf]
        %v402 = vld [vmem:[%s3 + $0x48] sm:$0xf]
        %v403 = vld [vmem:[%s3 + $0x4c] sm:$0xf]
        %v404 = vld [vmem:[%s3 + $0x50] sm:$0xf]
        %v405 = vld [vmem:[%s3 + $0x54] sm:$0xf]
        %v406 = vld [vmem:[%s3 + $0x58] sm:$0xf]
        %v407 = vld [vmem:[%s3 + $0x5c] sm:$0xf]
        %v408 = vld [vmem:[%s3 + $0x60] sm:$0xf]
        %v409 = vld [vmem:[%s3 + $0x64] sm:$0xf]
        %v410 = vld [vmem:[%s3 + $0x68] sm:$0xf]
        %v411 = vld [vmem:[%s3 + $0x6c] sm:$0xf]
        %v412 = vld [vmem:[%s3 + $0x70] sm:$0xf]
        %v413 = vld [vmem:[%s3 + $0x74] sm:$0xf]
        %v414 = vld [vmem:[%s3 + $0x78] sm:$0xf]
        %v415 = vld [vmem:[%s3 + $0x7c] sm:$0xf]
        %v416 = vld [vmem:[%s4] sm:$0x1]
        %v418 = vlaneseq
        %v419 = vshrl.u32 %v418, 7
        %v420 = vsub.s32 0, %v419
        %v421 = vrot.slane %v416, %v420
        %v455 = vunpack.c.l.b16 %v384
        %v456 = vunpack.c.l.b16 %v385
        %v457 = vunpack.c.l.b16 %v386
        %v458 = vunpack.c.l.b16 %v387
        %v459 = vunpack.c.l.b16 %v388
        %v460 = vunpack.c.l.b16 %v389
        %v461 = vunpack.c.l.b16 %v390
        %v462 = vunpack.c.l.b16 %v391
        %v463 = vunpack.c.l.b16 %v392
        %v464 = vunpack.c.l.b16 %v393
        %v465 = vunpack.c.l.b16 %v394
        %v466 = vunpack.c.l.b16 %v395
        %v467 = vunpack.c.l.b16 %v396
        %v468 = vunpack.c.l.b16 %v397
        %v469 = vunpack.c.l.b16 %v398
        %v470 = vunpack.c.l.b16 %v399
        %v471 = vunpack.c.l.b16 %v400
        %v472 = vunpack.c.l.b16 %v401
        %v473 = vunpack.c.l.b16 %v402
        %v474 = vunpack.c.l.b16 %v403
        %v475 = vunpack.c.l.b16 %v404
        %v476 = vunpack.c.l.b16 %v405
        %v477 = vunpack.c.l.b16 %v406
        %v478 = vunpack.c.l.b16 %v407
        %v479 = vunpack.c.l.b16 %v408
        %v480 = vunpack.c.l.b16 %v409
        %v481 = vunpack.c.l.b16 %v410
        %v482 = vunpack.c.l.b16 %v411
        %v483 = vunpack.c.l.b16 %v412
        %v484 = vunpack.c.l.b16 %v413
        %v485 = vunpack.c.l.b16 %v414
        %v486 = vunpack.c.l.b16 %v415
        %v487 = vpack.c.b16 %v456, %v455
        %v488 = vpack.c.b16 %v458, %v457
        %v489 = vpack.c.b16 %v460, %v459
        %v490 = vpack.c.b16 %v462, %v461
        %v491 = vpack.c.b16 %v464, %v463
        %v492 = vpack.c.b16 %v466, %v465
        %v493 = vpack.c.b16 %v468, %v467
        %v494 = vpack.c.b16 %v470, %v469
        %v495 = vpack.c.b16 %v472, %v471
        %v496 = vpack.c.b16 %v474, %v473
        %v497 = vpack.c.b16 %v476, %v475
        %v498 = vpack.c.b16 %v478, %v477
        %v499 = vpack.c.b16 %v480, %v479
        %v500 = vpack.c.b16 %v482, %v481
        %v501 = vpack.c.b16 %v484, %v483
        %v502 = vpack.c.b16 %v486, %v485
        %519 = vmatprep.subr.bf16.mxu0 0
        %520 = vmatpush1.bf16.msra.mxu0 %v487
        %521 = vmatprep.subr.bf16.mxu0 0
        %522 = vmatpush1.bf16.msra.mxu0 %v488
        %523 = vmatprep.subr.bf16.mxu0 0
        %524 = vmatpush1.bf16.msra.mxu0 %v489
        %525 = vmatprep.subr.bf16.mxu0 0
        %526 = vmatpush1.bf16.msra.mxu0 %v490
        %527 = vmatprep.subr.bf16.mxu0 0
        %528 = vmatpush1.bf16.msra.mxu0 %v491
        %529 = vmatprep.subr.bf16.mxu0 0
        %530 = vmatpush1.bf16.msra.mxu0 %v492
        %531 = vmatprep.subr.bf16.mxu0 0
        %532 = vmatpush1.bf16.msra.mxu0 %v493
        %533 = vmatprep.subr.bf16.mxu0 0
        %534 = vmatpush1.bf16.msra.mxu0 %v494
        %535 = vmatprep.subr.bf16.mxu0 0
        %536 = vmatpush1.bf16.msra.mxu0 %v495
        %537 = vmatprep.subr.bf16.mxu0 0
        %538 = vmatpush1.bf16.msra.mxu0 %v496
        %539 = vmatprep.subr.bf16.mxu0 0
        %540 = vmatpush1.bf16.msra.mxu0 %v497
        %541 = vmatprep.subr.bf16.mxu0 0
        %542 = vmatpush1.bf16.msra.mxu0 %v498
        %543 = vmatprep.subr.bf16.mxu0 0
        %544 = vmatpush1.bf16.msra.mxu0 %v499
        %545 = vmatprep.subr.bf16.mxu0 0
        %546 = vmatpush1.bf16.msra.mxu0 %v500
        %547 = vmatprep.subr.bf16.mxu0 0
        %548 = vmatpush1.bf16.msra.mxu0 %v501
        %549 = vmatprep.subr.bf16.mxu0 0
        %550 = vmatpush1.bf16.msra.mxu0 %v502
        %551 = vmatprep.mubr.bf16.mxu0 %v383
        %552 = vmatmul.mubr.bf16.gmra.mrb[0].mxu0 %v382
        %v553 = vpop.f32.mrb[0].mxu0
        %v554 = vadd.f32 %v421, %v553
        %v555 = vpop.f32.mrb[0].mxu0
        %v556 = vpop.f32.mrb[0].mxu0
        %v557 = vpop.f32.mrb[0].mxu0
        %558 = vdwg.mxu0
        %559 = vst [vmem:[%s215] sm:$0xff] %v554
        %s560 = sand.u32 %s137, 1
        %s561 = scalar_lea.sflag [#allocation3], %s560
        %s562 = sand.u32 %s137, 1
        %s563 = smul.addr %s562, 8
        %s564 = scalar_lea.vmem [#allocation2], %s563
        // Predicated region
        $region41: #{mlp_forward.1} parent=39 // pred_check
          %p565 = pneg %p147
        $region42: #{mlp_forward.1} parent=39 // pred_check_branch
          %567 = sbr.rel (%p565) target = $region44
        $region43: #{mlp_forward.1} parent=39 // pred_region
          %s569 = ssub.s32 128, 128
          %570 = vsyncadd %s561, %s569
          %s571 = smul.addr %s19, 128
          %s572 = scalar_lea.hbm %s5, %s571
          %s574 = sshll.u32 %s564, 4
          %s575 = int_to_ptr.vmem [resolvable:$true] %s574
          %577 = dma.vmem_to_hbm [thread:$0]  %s575, 128, %s572, %s561
        $region44: #{mlp_forward.1} parent=39 // pred_fallthru
          _
      $region40: #{mlp_forward.1} parent=5 // pred_fallthru
        _
      %p578 = scmp.le.s32.totalorder 2, %s14
      // Predicated region
      $region45: #{mlp_forward.1} parent=5 // pred_check
        %p579 = pneg %p578
      $region46: #{mlp_forward.1} parent=5 // pred_check_branch
        %581 = sbr.rel (%p579) target = $region48
      $region47: #{mlp_forward.1} parent=5 // pred_region
        %s582 = ssub.s32 %s14, 2
        // Predicated region
        $region49: #{mlp_forward.1} parent=47 // pred_check
          %p583 = pneg %p153
        $region50: #{mlp_forward.1} parent=47 // pred_check_branch
          %585 = sbr.rel (%p583) target = $region52
        $region51: #{mlp_forward.1} parent=47 // pred_region
          %s586 = sand.u32 %s138, 1
          %s587 = scalar_lea.sflag [#allocation3], %s586
          %s588 = sand.u32 %s138, 1
          %s589 = smul.addr %s588, 8
          %s590 = scalar_lea.vmem [#allocation2], %s589
          %591 = dma.done %s587, 128
        $region52: #{mlp_forward.1} parent=47 // pred_fallthru
          _
      $region48: #{mlp_forward.1} parent=5 // pred_fallthru
        _
    $region6: #{mlp_forward.1} parent=1 // loop_footer
      %s18 = sadd.s32 1, %s14
    $region7: #{mlp_forward.1} parent=1 // loop_footer_branch
      %13 = sbr.rel target = $region3
    $region8: #{mlp_forward.1} parent=1 // loop_exit
      _
    %592 = vsyncpa [#allocation3], 1
    %s593 = scalar_lea.sflag [#allocation3], 1
    %594 = vsyncpa %s593, 1

</llo_original>
